<compile_context>
chip_gen: v7x
topology: tpu7x:2x2x1
jax: 0.10.0
libtpu: 0.0.40
codegen_flags: <defaults>
</compile_context>

<pallas_src>
import functools

import jax
import jax.numpy as jnp
from jax.experimental import pallas as pl
from jax.experimental.pallas import tpu as pltpu


def _round_up(x, m):
    return (x + m - 1) // m * m


# ----------------------------- kernels --------------------------------------


def _make_window_kernel(*, K, dilation, padding, c_out, tile_t, slab, t_in,
                        has_prev, has_next, compute_dtype, approx_sigmoid):
    """stride == 1 path: build the (K*C_in, TILE_T) patch tile from the current
    input tile plus small prev/next slabs; conv zero-padding is an iota mask."""
    left = slab if has_prev else 0

    def kernel(*refs):
        i = 0
        parts = []
        if has_prev:
            parts.append(refs[i][0]); i += 1     # (C_in, SLAB):   x[t*T - SLAB : t*T]
        parts.append(refs[i][0]); i += 1         # (C_in, TILE_T): x[t*T : t*T + TILE_T]
        if has_next:
            parts.append(refs[i][0]); i += 1     # (C_in, SLAB):   x[(t+1)*T : (t+1)*T + SLAB]
        w_ref, b_ref, o_ref = refs[i], refs[i + 1], refs[i + 2]

        window = parts[0] if len(parts) == 1 else jnp.concatenate(parts, axis=-1)
        w_width = window.shape[-1]               # multiple of 128 (lane-dense)

        if padding > 0:
            # Global (unpadded) input position of each window column; zero out the
            # conv padding region and any partial-tile garbage.
            base = pl.program_id(1) * tile_t - left
            col = base + jax.lax.broadcasted_iota(jnp.int32, (1, w_width), 1)
            window = jnp.where(jnp.logical_and(col >= 0, col < t_in), window, 0)
        window = window.astype(compute_dtype)

        # In-VMEM im2col: K lane-shifted views stacked on the sublane axis.
        start0 = left - padding
        shifts = [window[:, start0 + k * dilation: start0 + k * dilation + tile_t]
                  for k in range(K)]
        patch = shifts[0] if K == 1 else jnp.concatenate(shifts, axis=0)

        acc = jnp.dot(w_ref[...], patch,
                      preferred_element_type=jnp.float32) + b_ref[...]
        y = acc[:c_out]
        g = acc[c_out:]
        if approx_sigmoid:
            gate = pl.reciprocal(1.0 + jnp.exp(-g), approx=True)   # EUP exp + rcp
        else:
            gate = jax.nn.sigmoid(g)
        o_ref[0] = (y * gate).astype(o_ref.dtype)

    return kernel


def _make_patch_kernel(*, c_out, approx_sigmoid):
    """Generic fallback (stride != 1): patch columns already materialized."""
    def kernel(p_ref, w_ref, b_ref, o_ref):
        acc = jnp.dot(w_ref[...], p_ref[0],
                      preferred_element_type=jnp.float32) + b_ref[...]
        y = acc[:c_out]
        g = acc[c_out:]
        gate = (pl.reciprocal(1.0 + jnp.exp(-g), approx=True) if approx_sigmoid
                else jax.nn.sigmoid(g))
        o_ref[0] = (y * gate).astype(o_ref.dtype)
    return kernel


# ----------------------------- host-side glue --------------------------------


def _im2col_1d(x, kernel_size, stride, padding, dilation, t_out):
    """x: (B, C_in, T) -> patches (B, C_in*K, T_out), row order (c_in, k)."""
    B, C_in, T = x.shape
    x_pad = jnp.pad(x, ((0, 0), (0, 0), (padding, padding)))
    cols = []
    for k in range(kernel_size):
        start = k * dilation
        sl = jax.lax.slice(
            x_pad, (0, 0, start),
            (B, C_in, start + (t_out - 1) * stride + 1),
            (1, 1, stride))
        cols.append(sl)
    patches = jnp.stack(cols, axis=2)            # (B, C_in, K, T_out)
    return patches.reshape(B, C_in * kernel_size, t_out)


def _pick_tile(t_out, quant, c_in, c_out, K, n_slabs, slab,
               in_bytes, out_bytes, op_bytes, budget=6 << 20, max_tile=8192):
    """Largest TILE_T (multiple of quant, <= round_up(T_out)) within the VMEM budget."""
    cap = max(quant, min(_round_up(t_out, quant), _round_up(max_tile, quant)))
    best_tile, best_est = quant, 0
    m = 1
    while quant * m <= cap:
        tile = quant * m
        est = (2 * c_in * tile * in_bytes                      # current tile (double-buffered)
               + 2 * n_slabs * c_in * slab * in_bytes          # prev/next slabs (double-buffered)
               + 2 * c_out * tile * out_bytes                  # output tile (double-buffered)
               + c_in * (tile + n_slabs * slab) * max(in_bytes, op_bytes)   # window
               + K * c_in * tile * op_bytes                    # patch
               + 2 * c_out * tile * 4)                         # f32 accumulator
        if est <= budget or m == 1:
            best_tile, best_est = tile, est
        else:
            break
        m *= 2
    return best_tile, best_est


@functools.partial(
    jax.jit,
    static_argnames=("kernel_size", "stride", "padding", "dilation", "compute_dtype"))
def glu1d_forward(x, w_map, b_map, w_gate, b_gate, *, kernel_size, stride=1,
                  padding=0, dilation=1, compute_dtype=jnp.bfloat16):
    """GLU1d forward.  x: (B, C_in, T); w_*: (C_out, C_in, K); b_*: (C_out,)."""
    B, C_in, T = x.shape
    C_out = w_map.shape[0]
    K = kernel_size
    out_dtype = x.dtype                               # preserve the module's I/O dtype
    op_dtype = jnp.dtype(compute_dtype)
    approx_sigmoid = op_dtype == jnp.dtype(jnp.bfloat16)

    halo = dilation * (K - 1)
    T_out = (T + 2 * padding - halo - 1) // stride + 1
    assert T_out > 0, "invalid conv geometry"

    in_bytes = jnp.dtype(x.dtype).itemsize
    out_bytes = jnp.dtype(out_dtype).itemsize
    op_bytes = op_dtype.itemsize

    b_cat = jnp.concatenate([b_map, b_gate], axis=0).reshape(2 * C_out, 1)
    b_cat = b_cat.astype(jnp.float32)
    w_stack = jnp.concatenate([w_map, w_gate], axis=0)        # (2*C_out, C_in, K)

    # -------- tiling --------
    has_prev = padding > 0
    has_next = halo > 0
    slab = _round_up(max(padding, halo, 1), 128) if (has_prev or has_next) else 0
    quant = max(slab, 128)
    n_slabs = int(has_prev) + int(has_next)
    TILE_T, tile_bytes = _pick_tile(T_out, quant, C_in, C_out, K, n_slabs, slab,
                                    in_bytes, out_bytes, op_bytes)
    num_t = pl.cdiv(T_out, TILE_T)
    T_out_pad = num_t * TILE_T

    weight_bytes = 2 * (2 * C_out) * K * C_in * op_bytes      # double-buffered weight slab
    vmem_limit = int(min(100 * 2**20,
                         max(32 * 2**20, (tile_bytes + weight_bytes) * 5 // 4)))

    flops = 2 * B * (2 * C_out) * (C_in * K) * T_out + 4 * B * C_out * T_out
    cost = pl.CostEstimate(
        flops=int(flops),
        transcendentals=int(B * C_out * T_out),
        bytes_accessed=int(in_bytes * x.size + 2 * op_bytes * w_map.size
                           + 8 * C_out + out_bytes * B * C_out * T_out))
    cparams = pltpu.CompilerParams(
        dimension_semantics=("parallel", "parallel"),
        vmem_limit_bytes=vmem_limit)
    out_shape = jax.ShapeDtypeStruct((B, C_out, T_out_pad), out_dtype)

    # Windowed path: stride 1 and every output tile's "current" input block is a real
    # block of x (no trailing output tile that lies entirely past the input).
    use_window = (stride == 1) and (num_t <= pl.cdiv(T, TILE_T)) \
        and (padding <= max(slab, 0) or not has_prev) and (halo <= max(slab, 0) or not has_next)

    if use_window:
        # (k, c_in)-minor weight layout matches the in-kernel patch row order.
        w_cat = jnp.transpose(w_stack, (0, 2, 1)).reshape(2 * C_out, K * C_in)
        w_cat = w_cat.astype(op_dtype)

        r = TILE_T // slab if slab else 0
        n_slab_blocks = pl.cdiv(T, slab) if slab else 1

        in_specs, args = [], []
        if has_prev:
            in_specs.append(pl.BlockSpec(
                (1, C_in, slab),
                lambda b, t, r=r, n=n_slab_blocks: (b, 0, jnp.clip(t * r - 1, 0, n - 1))))
            args.append(x)
        in_specs.append(pl.BlockSpec((1, C_in, TILE_T), lambda b, t: (b, 0, t)))
        args.append(x)
        if has_next:
            in_specs.append(pl.BlockSpec(
                (1, C_in, slab),
                lambda b, t, r=r, n=n_slab_blocks: (b, 0, jnp.clip((t + 1) * r, 0, n - 1))))
            args.append(x)
        in_specs.append(pl.BlockSpec((2 * C_out, K * C_in), lambda b, t: (0, 0)))
        args.append(w_cat)
        in_specs.append(pl.BlockSpec((2 * C_out, 1), lambda b, t: (0, 0)))
        args.append(b_cat)

        kernel = _make_window_kernel(
            K=K, dilation=dilation, padding=padding, c_out=C_out, tile_t=TILE_T,
            slab=slab, t_in=T, has_prev=has_prev, has_next=has_next,
            compute_dtype=op_dtype, approx_sigmoid=approx_sigmoid)
        grid_spec = pltpu.PrefetchScalarGridSpec(
            num_scalar_prefetch=0, grid=(B, num_t), in_specs=in_specs,
            out_specs=pl.BlockSpec((1, C_out, TILE_T), lambda b, t: (b, 0, t)))
        out_pad = pl.pallas_call(
            kernel, out_shape=out_shape, grid_spec=grid_spec,
            compiler_params=cparams, cost_estimate=cost)(*args)
    else:
        # Generic fallback (stride != 1 or odd geometry): host-side im2col,
        # (c_in, k)-minor row order, same fused stacked matmul.
        w_cat = w_stack.reshape(2 * C_out, C_in * K).astype(op_dtype)
        patches = _im2col_1d(x.astype(op_dtype), K, stride, padding, dilation, T_out)
        patches = jnp.pad(patches, ((0, 0), (0, 0), (0, T_out_pad - T_out)))

        kernel = _make_patch_kernel(c_out=C_out, approx_sigmoid=approx_sigmoid)
        grid_spec = pltpu.PrefetchScalarGridSpec(
            num_scalar_prefetch=0, grid=(B, num_t),
            in_specs=[pl.BlockSpec((1, C_in * K, TILE_T), lambda b, t: (b, 0, t)),
                      pl.BlockSpec((2 * C_out, C_in * K), lambda b, t: (0, 0)),
                      pl.BlockSpec((2 * C_out, 1), lambda b, t: (0, 0))],
            out_specs=pl.BlockSpec((1, C_out, TILE_T), lambda b, t: (b, 0, t)))
        out_pad = pl.pallas_call(
            kernel, out_shape=out_shape, grid_spec=grid_spec,
            compiler_params=cparams, cost_estimate=cost)(patches, w_cat, b_cat)

    # No-op when T_out is already TILE_T aligned; otherwise a cheap trailing slice.
    return out_pad[:, :, :T_out]


def _reference(x, w_map, b_map, w_gate, b_gate, stride, padding, dilation):
    """Pure-JAX reference via lax.conv_general_dilated (matches torch Conv1d)."""
    dn = jax.lax.conv_dimension_numbers(x.shape, w_map.shape, ("NCH", "OIH", "NCH"))
    conv = lambda w: jax.lax.conv_general_dilated(
        x, w, window_strides=(stride,), padding=[(padding, padding)],
        rhs_dilation=(dilation,), dimension_numbers=dn)
    y = conv(w_map) + b_map[None, :, None]
    g = conv(w_gate) + b_gate[None, :, None]
    return y * jax.nn.sigmoid(g)


if __name__ == "__main__":
    # Small deterministic example consistent with the module: input (B, C_in, T).
    B, C_in, C_out, T = 2, 4, 4, 16
    keys = jax.random.split(jax.random.PRNGKey(0), 9)
    x = jax.random.normal(keys[0], (B, C_in, T), dtype=jnp.float32)

    def conv_params(kw, kb, kw2, kb2, ksize):
        bound = (C_in * ksize) ** -0.5
        w_m = jax.random.uniform(kw, (C_out, C_in, ksize), jnp.float32, -bound, bound)
        b_m = jax.random.uniform(kb, (C_out,), jnp.float32, -bound, bound)
        w_g = jax.random.uniform(kw2, (C_out, C_in, ksize), jnp.float32, -bound, bound)
        b_g = jax.random.uniform(kb2, (C_out,), jnp.float32, -bound, bound)
        return w_m, b_m, w_g, b_g

    params3 = conv_params(keys[1], keys[2], keys[3], keys[4], 3)
    params1 = conv_params(keys[5], keys[6], keys[7], keys[8], 1)

    cases = [
        (dict(kernel_size=3, stride=1, padding=1, dilation=1), params3),  # windowed fast path
        (dict(kernel_size=3, stride=1, padding=2, dilation=2), params3),  # windowed + dilation
        (dict(kernel_size=3, stride=2, padding=1, dilation=1), params3),  # im2col fallback
        (dict(kernel_size=1, stride=1, padding=0, dilation=1), params1),  # pointwise direct path
    ]
    for cfg, params in cases:
        ref = _reference(x, *params, cfg["stride"], cfg["padding"], cfg["dilation"])
        for dt, tol in ((jnp.float32, 1e-5), (jnp.bfloat16, 5e-2)):
            out = glu1d_forward(x, *params, compute_dtype=dt, **cfg)
            out = jax.block_until_ready(out)
            assert out.shape == ref.shape, (cfg, dt, out.shape, ref.shape)
            assert out.dtype == x.dtype, (cfg, dt, out.dtype)
            assert jnp.allclose(out.astype(jnp.float32), ref, atol=tol, rtol=tol), \
                f"mismatch vs reference: {cfg}, compute_dtype={dt}"

    print("KERNEL_OK")
</pallas_src>

<mosaic_0001>
module attributes {stable_mosaic.version = 11 : i64} {
  func.func @kernel(%arg0: i32, %arg1: i32, %arg2: memref<1x4x128xf32, #tpu.memory_space<vmem>>, %arg3: memref<1x4x128xf32, #tpu.memory_space<vmem>>, %arg4: memref<1x4x128xf32, #tpu.memory_space<vmem>>, %arg5: memref<8x12xf32, #tpu.memory_space<vmem>>, %arg6: memref<8x1xf32, #tpu.memory_space<vmem>>, %arg7: memref<1x4x128xf32, #tpu.memory_space<vmem>>) attributes {dimension_semantics = [#tpu.dimension_semantics<parallel>, #tpu.dimension_semantics<parallel>], iteration_bounds = array<i64: 2, 1>, scalar_prefetch = 0 : i64, scratch_operands = 0 : i64, tpu.core_type = #tpu.core_type<tc>, window_params = [{transform_indices = @transform_0, window_bounds = array<i64: 1, 4, 128>}, {transform_indices = @transform_1, window_bounds = array<i64: 1, 4, 128>}, {transform_indices = @transform_2, window_bounds = array<i64: 1, 4, 128>}, {pipeline_mode = #tpu.pipeline_mode<synchronous>, transform_indices = @transform_3, window_bounds = array<i64: 8, 12>}, {pipeline_mode = #tpu.pipeline_mode<synchronous>, transform_indices = @transform_4, window_bounds = array<i64: 8, 1>}, {transform_indices = @transform_5, window_bounds = array<i64: 1, 4, 128>}]} {
    %c0 = arith.constant 0 : index
    %c0_0 = arith.constant 0 : index
    %c0_1 = arith.constant 0 : index
    %0 = vector.load %arg2[%c0, %c0_0, %c0_1] : memref<1x4x128xf32, #tpu.memory_space<vmem>>, vector<1x4x128xf32>
    %1 = vector.shape_cast %0 : vector<1x4x128xf32> to vector<4x128xf32>
    %c0_2 = arith.constant 0 : index
    %c0_3 = arith.constant 0 : index
    %c0_4 = arith.constant 0 : index
    %2 = vector.load %arg3[%c0_2, %c0_3, %c0_4] : memref<1x4x128xf32, #tpu.memory_space<vmem>>, vector<1x4x128xf32>
    %3 = vector.shape_cast %2 : vector<1x4x128xf32> to vector<4x128xf32>
    %c0_5 = arith.constant 0 : index
    %c0_6 = arith.constant 0 : index
    %c0_7 = arith.constant 0 : index
    %4 = vector.load %arg4[%c0_5, %c0_6, %c0_7] : memref<1x4x128xf32, #tpu.memory_space<vmem>>, vector<1x4x128xf32>
    %5 = vector.shape_cast %4 : vector<1x4x128xf32> to vector<4x128xf32>
    %6 = tpu.concatenate %1, %3, %5 in 1 : vector<4x128xf32>, vector<4x128xf32>, vector<4x128xf32> -> vector<4x384xf32>
    %c128_i32 = arith.constant 128 : i32
    %7 = arith.muli %arg1, %c128_i32 : i32
    %c128_i32_8 = arith.constant 128 : i32
    %8 = arith.subi %7, %c128_i32_8 : i32
    %9 = tpu.iota {dimensions = array<i32: 1>} : vector<1x384xi32>
    %10 = vector.broadcast %8 : i32 to vector<1x384xi32>
    %11 = arith.addi %10, %9 : vector<1x384xi32>
    %c0_i32 = arith.constant 0 : i32
    %12 = vector.broadcast %c0_i32 : i32 to vector<1x384xi32>
    %13 = arith.cmpi sge, %11, %12 : vector<1x384xi32>
    %c16_i32 = arith.constant 16 : i32
    %14 = vector.broadcast %c16_i32 : i32 to vector<1x384xi32>
    %15 = arith.cmpi slt, %11, %14 : vector<1x384xi32>
    %16 = arith.andi %13, %15 : vector<1x384xi1>
    %c0_i32_9 = arith.constant 0 : i32
    %17 = arith.sitofp %c0_i32_9 : i32 to f32
    %18 = vector.shape_cast %16 : vector<1x384xi1> to vector<1x384xi1>
    %19 = vector.broadcast %18 : vector<1x384xi1> to vector<4x384xi1>
    %20 = vector.broadcast %17 : f32 to vector<4x384xf32>
    %21 = arith.select %19, %6, %20 : vector<4x384xi1>, vector<4x384xf32>
    %22 = vector.extract_strided_slice %21 {offsets = [0, 127], sizes = [4, 128], strides = [1, 1]} : vector<4x384xf32> to vector<4x128xf32>
    %23 = vector.extract_strided_slice %21 {offsets = [0, 128], sizes = [4, 128], strides = [1, 1]} : vector<4x384xf32> to vector<4x128xf32>
    %24 = vector.extract_strided_slice %21 {offsets = [0, 129], sizes = [4, 128], strides = [1, 1]} : vector<4x384xf32> to vector<4x128xf32>
    %25 = tpu.concatenate %22, %23, %24 in 0 : vector<4x128xf32>, vector<4x128xf32>, vector<4x128xf32> -> vector<12x128xf32>
    %c0_10 = arith.constant 0 : index
    %c0_11 = arith.constant 0 : index
    %26 = vector.load %arg5[%c0_10, %c0_11] : memref<8x12xf32, #tpu.memory_space<vmem>>, vector<8x12xf32>
    %cst = arith.constant dense<0.000000e+00> : vector<8x128xf32>
    %27 = tpu.matmul %26, %25, %cst {dimension_numbers = #tpu.dot_dimension_numbers<[1], [0], [0], [1], [0, 0, 1, 1], [], []>} : vector<8x12xf32>, vector<12x128xf32>, vector<8x128xf32> -> vector<8x128xf32>
    %c0_12 = arith.constant 0 : index
    %c0_13 = arith.constant 0 : index
    %28 = vector.load %arg6[%c0_12, %c0_13] : memref<8x1xf32, #tpu.memory_space<vmem>>, vector<8x1xf32>
    %29 = vector.broadcast %28 : vector<8x1xf32> to vector<8x128xf32>
    %30 = arith.addf %27, %29 : vector<8x128xf32>
    %31 = vector.extract_strided_slice %30 {offsets = [0, 0], sizes = [4, 128], strides = [1, 1]} : vector<8x128xf32> to vector<4x128xf32>
    %32 = vector.extract_strided_slice %30 {offsets = [4, 0], sizes = [4, 128], strides = [1, 1]} : vector<8x128xf32> to vector<4x128xf32>
    %33 = arith.negf %32 : vector<4x128xf32>
    %34 = math.exp %33 : vector<4x128xf32>
    %cst_14 = arith.constant 1.000000e+00 : f32
    %35 = vector.broadcast %cst_14 : f32 to vector<4x128xf32>
    %36 = arith.addf %35, %34 : vector<4x128xf32>
    %37 = arith.divf %35, %36 : vector<4x128xf32>
    %38 = arith.mulf %31, %37 : vector<4x128xf32>
    %c0_15 = arith.constant 0 : index
    %c0_16 = arith.constant 0 : index
    %c0_17 = arith.constant 0 : index
    %39 = vector.load %arg7[%c0_15, %c0_16, %c0_17] : memref<1x4x128xf32, #tpu.memory_space<vmem>>, vector<1x4x128xf32>
    %40 = vector.shape_cast %39 : vector<1x4x128xf32> to vector<4x128xf32>
    %41 = vector.shape_cast %38 : vector<4x128xf32> to vector<1x4x128xf32>
    tpu.vector_store %arg7[%c0_15, %c0_16, %c0_17], %41 {strides = array<i32>} : memref<1x4x128xf32, #tpu.memory_space<vmem>>, vector<1x4x128xf32>,
    return
  }
  func.func @transform_0(%arg0: i32, %arg1: i32) -> (i32, i32, i32) {
    %c1_i32 = arith.constant 1 : i32
    %0 = arith.muli %arg1, %c1_i32 : i32
    %c1_i32_0 = arith.constant 1 : i32
    %1 = arith.subi %0, %c1_i32_0 : i32
    %c0_i32 = arith.constant 0 : i32
    %c0_i32_1 = arith.constant 0 : i32
    %2 = arith.maxsi %c0_i32, %1 : i32
    %3 = arith.minsi %c0_i32_1, %2 : i32
    %c0_i32_2 = arith.constant 0 : i32
    %c0_i32_3 = arith.constant 0 : i32
    return %arg0, %c0_i32_2, %3 : i32, i32, i32
  }
  func.func @transform_1(%arg0: i32, %arg1: i32) -> (i32, i32, i32) {
    %c0_i32 = arith.constant 0 : i32
    %c0_i32_0 = arith.constant 0 : i32
    return %arg0, %c0_i32, %arg1 : i32, i32, i32
  }
  func.func @transform_2(%arg0: i32, %arg1: i32) -> (i32, i32, i32) {
    %c1_i32 = arith.constant 1 : i32
    %0 = arith.addi %arg1, %c1_i32 : i32
    %c1_i32_0 = arith.constant 1 : i32
    %1 = arith.muli %0, %c1_i32_0 : i32
    %c0_i32 = arith.constant 0 : i32
    %c0_i32_1 = arith.constant 0 : i32
    %2 = arith.maxsi %c0_i32, %1 : i32
    %3 = arith.minsi %c0_i32_1, %2 : i32
    %c0_i32_2 = arith.constant 0 : i32
    %c0_i32_3 = arith.constant 0 : i32
    return %arg0, %c0_i32_2, %3 : i32, i32, i32
  }
  func.func @transform_3(%arg0: i32, %arg1: i32) -> (i32, i32) {
    %c0_i32 = arith.constant 0 : i32
    %c0_i32_0 = arith.constant 0 : i32
    %c0_i32_1 = arith.constant 0 : i32
    return %c0_i32, %c0_i32_0 : i32, i32
  }
  func.func @transform_4(%arg0: i32, %arg1: i32) -> (i32, i32) {
    %c0_i32 = arith.constant 0 : i32
    %c0_i32_0 = arith.constant 0 : i32
    %c0_i32_1 = arith.constant 0 : i32
    return %c0_i32, %c0_i32_0 : i32, i32
  }
  func.func @transform_5(%arg0: i32, %arg1: i32) -> (i32, i32, i32) {
    %c0_i32 = arith.constant 0 : i32
    %c0_i32_0 = arith.constant 0 : i32
    return %arg0, %c0_i32, %arg1 : i32, i32, i32
  }
}

</mosaic_0001>

<llo_original>
// kernel: glu1d_forward.1
$region0: #{glu1d_forward.1}
  #allocation0 [shape = 'u32[]', space=smem, size = 0x4, offset = 0x4, fixed_abs, tag = 'smem constant byte address 0x4 - core index']
  #allocation1 [shape = 'u32[144,128]{1,0:T(1,128)}', space=vmem, size = 0x12000, scoped, tag = 'internal scratch']
  %s0 = inlined_call_operand.vmem [shape: f32[2,4,16], index: 0, kind: input, shape index: {}, may-alias: {0,1,2}]
  %s1 = inlined_call_operand.vmem [shape: f32[2,4,16], index: 1, kind: input, shape index: {}, may-alias: {0,1,2}]
  %s2 = inlined_call_operand.vmem [shape: f32[2,4,16], index: 2, kind: input, shape index: {}, may-alias: {0,1,2}]
  %s3 = inlined_call_operand.vmem [shape: f32[8,12], index: 3, kind: input, shape index: {}]
  %s4 = inlined_call_operand.vmem [shape: f32[8,1], index: 4, kind: input, shape index: {}]
  %s5 = inlined_call_operand.hbm [shape: f32[2,4,128], index: 5, kind: output, shape index: {}]
  %s6 = sld [smem:[#allocation0]]
  $region53: #{glu1d_forward.1} parent=0
    _
  %s8 = ssub.s32 1, %s6
  %s9 = scalar_select 0, %s8, %s6
  $region1: #{glu1d_forward.1} parent=0
    #allocation2 [shape = 'u8[4096]{0}', space=vmem, size = 0x1000, scoped, tag = 'output window, operand 0']
    #allocation3 [shape = 's32[2]{0}', space=sflag, size = 0x8, scoped, tag = 'scoped memory for glu1d_forward.1']
    %10 = vsyncpa [#allocation3], 0
    %s11 = scalar_lea.sflag [#allocation3], 1
    %12 = vsyncpa %s11, 0
    loop: start=0, step=1, limit=4
    $region2: #{glu1d_forward.1} parent=1 // loop_pre_header
      _
    $region3: #{glu1d_forward.1} parent=1 // loop_header
      %s14 = sphi 0, %s18
      %p15 = scmp.ge.s32.totalorder %s14, 4
      %s21 = sphi 0, %s33
      %s22 = sphi 0, %s29
      %s23 = sphi 0, %s21
      %s24 = sphi 0, %s22
      %s25 = sphi 0, %s23
      %s26 = sphi 0, %s24
      %s48 = sphi 0, %s50
      %s51 = sphi 0, %s48
      %s52 = sphi 0, %s51
      %s68 = sphi 0, %s52
      %s76 = sphi 0, %s78
      %s79 = sphi 0, %s76
      %s80 = sphi 0, %s79
      %s96 = sphi 0, %s80
      %s114 = sphi 0, %s116
      %s117 = sphi 0, %s114
      %s118 = sphi 0, %s117
      %s134 = sphi 0, %s118
      %s138 = sphi 0, %s138
      %s140 = sphi 0, %s138
      %s141 = sphi 0, %s140
      %s155 = sphi 0, %s141
      %s159 = sphi 0, %s159
      %s161 = sphi 0, %s159
      %s162 = sphi 0, %s161
      %s176 = sphi 0, %s162
      %s184 = sphi 0, %s186
      %s187 = sphi 0, %s184
      %s188 = sphi 0, %s187
      %s204 = sphi 0, %s188
    $region4: #{glu1d_forward.1} parent=1 // loop_header_branch
      %17 = sbr.rel (%p15) target = $region8
    $region5: #{glu1d_forward.1} parent=1 // loop_body
      %s19 = ssub.s32 %s14, 1
      %s20 = ssub.s32 %s14, 2
      %s27 = sadd.s32 1, %s22
      %p28 = scmp.ge.s32.totalorder %s27, 1
      %s29 = scalar_select %p28, 0, %s27
      %s30 = sadd.s32 1, %s21
      %s31 = scalar_select %p28, %s30, %s21
      %p32 = scmp.ge.s32.totalorder %s31, 2
      %s33 = scalar_select %p32, 0, %s31
      %s34 = ssub.s32 %s22, 1
      %p35 = scmp.gt.s32.totalorder %s34, 0
      %s36 = scalar_select %p35, %s34, 0
      %p37 = scmp.lt.s32.totalorder %s36, 0
      %s38 = scalar_select %p37, %s36, 0
      %s39 = ssub.s32 %s29, 1
      %p40 = scmp.gt.s32.totalorder %s39, 0
      %s41 = scalar_select %p40, %s39, 0
      %p42 = scmp.lt.s32.totalorder %s41, 0
      %s43 = scalar_select %p42, %s41, 0
      %s44 = ssub.s32 %s21, %s33
      %s45 = ssub.s32 %s38, %s43
      %s46 = sor.u32 %s44, %s45
      %p47 = scmp.eq.s32.totalorder %s46, 0
      %s49 = sadd.s32 %s48, 1
      %s50 = scalar_select %p47, %s48, %s49
      %p53 = pneg %p47
      %p54 = scmp.eq.s32.totalorder %s14, 1
      %p55 = por %p53, %p54
      %p56 = scmp.ne.s32.totalorder %s48, %s51
      %p57 = scmp.eq.s32.totalorder %s14, 0
      %p58 = por %p56, %p57
      %p59 = scmp.ne.s32.totalorder %s48, %s51
      %p60 = scmp.eq.s32.totalorder %s19, 1
      %p61 = por %p59, %p60
      %p62 = scmp.ne.s32.totalorder %s51, %s52
      %p63 = scmp.eq.s32.totalorder %s19, 0
      %p64 = por %p62, %p63
      %p65 = scmp.ne.s32.totalorder %s51, %s52
      %p66 = scmp.eq.s32.totalorder %s20, 1
      %p67 = por %p65, %p66
      %p69 = scmp.ne.s32.totalorder %s52, %s68
      %p70 = scmp.eq.s32.totalorder %s20, 0
      %p71 = por %p69, %p70
      %s72 = ssub.s32 %s21, %s33
      %s73 = ssub.s32 %s22, %s29
      %s74 = sor.u32 %s72, %s73
      %p75 = scmp.eq.s32.totalorder %s74, 0
      %s77 = sadd.s32 %s76, 1
      %s78 = scalar_select %p75, %s76, %s77
      %p81 = pneg %p75
      %p82 = scmp.eq.s32.totalorder %s14, 1
      %p83 = por %p81, %p82
      %p84 = scmp.ne.s32.totalorder %s76, %s79
      %p85 = scmp.eq.s32.totalorder %s14, 0
      %p86 = por %p84, %p85
      %p87 = scmp.ne.s32.totalorder %s76, %s79
      %p88 = scmp.eq.s32.totalorder %s19, 1
      %p89 = por %p87, %p88
      %p90 = scmp.ne.s32.totalorder %s79, %s80
      %p91 = scmp.eq.s32.totalorder %s19, 0
      %p92 = por %p90, %p91
      %p93 = scmp.ne.s32.totalorder %s79, %s80
      %p94 = scmp.eq.s32.totalorder %s20, 1
      %p95 = por %p93, %p94
      %p97 = scmp.ne.s32.totalorder %s80, %s96
      %p98 = scmp.eq.s32.totalorder %s20, 0
      %p99 = por %p97, %p98
      %s100 = sadd.s32 %s22, 1
      %p101 = scmp.gt.s32.totalorder %s100, 0
      %s102 = scalar_select %p101, %s100, 0
      %p103 = scmp.lt.s32.totalorder %s102, 0
      %s104 = scalar_select %p103, %s102, 0
      %s105 = sadd.s32 %s29, 1
      %p106 = scmp.gt.s32.totalorder %s105, 0
      %s107 = scalar_select %p106, %s105, 0
      %p108 = scmp.lt.s32.totalorder %s107, 0
      %s109 = scalar_select %p108, %s107, 0
      %s110 = ssub.s32 %s21, %s33
      %s111 = ssub.s32 %s104, %s109
      %s112 = sor.u32 %s110, %s111
      %p113 = scmp.eq.s32.totalorder %s112, 0
      %s115 = sadd.s32 %s114, 1
      %s116 = scalar_select %p113, %s114, %s115
      %p119 = pneg %p113
      %p120 = scmp.eq.s32.totalorder %s14, 1
      %p121 = por %p119, %p120
      %p122 = scmp.ne.s32.totalorder %s114, %s117
      %p123 = scmp.eq.s32.totalorder %s14, 0
      %p124 = por %p122, %p123
      %p125 = scmp.ne.s32.totalorder %s114, %s117
      %p126 = scmp.eq.s32.totalorder %s19, 1
      %p127 = por %p125, %p126
      %p128 = scmp.ne.s32.totalorder %s117, %s118
      %p129 = scmp.eq.s32.totalorder %s19, 0
      %p130 = por %p128, %p129
      %p131 = scmp.ne.s32.totalorder %s117, %s118
      %p132 = scmp.eq.s32.totalorder %s20, 1
      %p133 = por %p131, %p132
      %p135 = scmp.ne.s32.totalorder %s118, %s134
      %p136 = scmp.eq.s32.totalorder %s20, 0
      %p137 = por %p135, %p136
      %s139 = sadd.s32 %s138, 1
      %p142 = scmp.eq.s32.totalorder %s14, 1
      %p143 = scmp.ne.s32.totalorder %s138, %s140
      %p144 = scmp.eq.s32.totalorder %s14, 0
      %p145 = por %p143, %p144
      %p146 = scmp.ne.s32.totalorder %s138, %s140
      %p147 = scmp.eq.s32.totalorder %s19, 1
      %p148 = por %p146, %p147
      %p149 = scmp.ne.s32.totalorder %s140, %s141
      %p150 = scmp.eq.s32.totalorder %s19, 0
      %p151 = por %p149, %p150
      %p152 = scmp.ne.s32.totalorder %s140, %s141
      %p153 = scmp.eq.s32.totalorder %s20, 1
      %p154 = por %p152, %p153
      %p156 = scmp.ne.s32.totalorder %s141, %s155
      %p157 = scmp.eq.s32.totalorder %s20, 0
      %p158 = por %p156, %p157
      %s160 = sadd.s32 %s159, 1
      %p163 = scmp.eq.s32.totalorder %s14, 1
      %p164 = scmp.ne.s32.totalorder %s159, %s161
      %p165 = scmp.eq.s32.totalorder %s14, 0
      %p166 = por %p164, %p165
      %p167 = scmp.ne.s32.totalorder %s159, %s161
      %p168 = scmp.eq.s32.totalorder %s19, 1
      %p169 = por %p167, %p168
      %p170 = scmp.ne.s32.totalorder %s161, %s162
      %p171 = scmp.eq.s32.totalorder %s19, 0
      %p172 = por %p170, %p171
      %p173 = scmp.ne.s32.totalorder %s161, %s162
      %p174 = scmp.eq.s32.totalorder %s20, 1
      %p175 = por %p173, %p174
      %p177 = scmp.ne.s32.totalorder %s162, %s176
      %p178 = scmp.eq.s32.totalorder %s20, 0
      %p179 = por %p177, %p178
      %s180 = ssub.s32 %s21, %s33
      %s181 = ssub.s32 %s22, %s29
      %s182 = sor.u32 %s180, %s181
      %p183 = scmp.eq.s32.totalorder %s182, 0
      %s185 = sadd.s32 %s184, 1
      %s186 = scalar_select %p183, %s184, %s185
      %p189 = pneg %p183
      %p190 = scmp.eq.s32.totalorder %s14, 1
      %p191 = por %p189, %p190
      %p192 = scmp.ne.s32.totalorder %s184, %s187
      %p193 = scmp.eq.s32.totalorder %s14, 0
      %p194 = por %p192, %p193
      %p195 = scmp.ne.s32.totalorder %s184, %s187
      %p196 = scmp.eq.s32.totalorder %s19, 1
      %p197 = por %p195, %p196
      %p198 = scmp.ne.s32.totalorder %s187, %s188
      %p199 = scmp.eq.s32.totalorder %s19, 0
      %p200 = por %p198, %p199
      %p201 = scmp.ne.s32.totalorder %s187, %s188
      %p202 = scmp.eq.s32.totalorder %s20, 1
      %p203 = por %p201, %p202
      %p205 = scmp.ne.s32.totalorder %s188, %s204
      %p206 = scmp.eq.s32.totalorder %s20, 0
      %p207 = por %p205, %p206
      %p208 = scmp.le.s32.totalorder 1, %s14
      %p209 = scmp.lt.s32.totalorder %s14, 3
      %p210 = pnand %p208, %p209
      %p211 = pneg %p210
      // Predicated region
      $region9: #{glu1d_forward.1} parent=5 // pred_check
        _
      $region10: #{glu1d_forward.1} parent=5 // pred_check_branch
        %213 = sbr.rel (%p210) target = $region12
      $region11: #{glu1d_forward.1} parent=5 // pred_region
        %s214 = ssub.s32 %s14, 1
        // Predicated region
        $region13: #{glu1d_forward.1} parent=11 // pred_check
          %p215 = pneg %p151
        $region14: #{glu1d_forward.1} parent=11 // pred_check_branch
          %217 = sbr.rel (%p215) target = $region16
        $region15: #{glu1d_forward.1} parent=11 // pred_region
          _
        $region16: #{glu1d_forward.1} parent=11 // pred_fallthru
          _
        // Predicated region
        $region17: #{glu1d_forward.1} parent=11 // pred_check
          %p218 = pneg %p172
        $region18: #{glu1d_forward.1} parent=11 // pred_check_branch
          %220 = sbr.rel (%p218) target = $region20
        $region19: #{glu1d_forward.1} parent=11 // pred_region
          _
        $region20: #{glu1d_forward.1} parent=11 // pred_fallthru
          _
      $region12: #{glu1d_forward.1} parent=5 // pred_fallthru
        _
      %p221 = scmp.lt.s32.totalorder %s14, 2
      // Predicated region
      $region21: #{glu1d_forward.1} parent=5 // pred_check
        %p222 = pneg %p221
      $region22: #{glu1d_forward.1} parent=5 // pred_check_branch
        %224 = sbr.rel (%p222) target = $region24
      $region23: #{glu1d_forward.1} parent=5 // pred_region
        // Predicated region
        $region25: #{glu1d_forward.1} parent=23 // pred_check
          %p225 = pneg %p58
        $region26: #{glu1d_forward.1} parent=23 // pred_check_branch
          %227 = sbr.rel (%p225) target = $region28
        $region27: #{glu1d_forward.1} parent=23 // pred_region
          %s228 = ssub.s32 %s22, 1
          %p229 = scmp.gt.s32.totalorder %s228, 0
          %s230 = scalar_select %p229, %s228, 0
          %p231 = scmp.lt.s32.totalorder %s230, 0
          %s232 = scalar_select %p231, %s230, 0
          %p233 = scmp.lt.s32.totalorder %s21, 1
          %s234 = scalar_select %p233, %s21, 1
          %p235 = scmp.lt.s32.totalorder %s232, 0
          %s236 = scalar_select %p235, %s232, 0
          %s237 = sadd.s32 %s236, %s234
          %s238 = smul.addr %s237, 4
          %s239 = scalar_lea.vmem %s0, %s238
          %s240 = ssub.s32 %s22, 1
          %p241 = scmp.gt.s32.totalorder %s240, 0
          %s242 = scalar_select %p241, %s240, 0
          %p243 = scmp.lt.s32.totalorder %s242, 0
          %s244 = scalar_select %p243, %s242, 0
        $region28: #{glu1d_forward.1} parent=23 // pred_fallthru
          _
        // Predicated region
        $region29: #{glu1d_forward.1} parent=23 // pred_check
          %p245 = pneg %p86
        $region30: #{glu1d_forward.1} parent=23 // pred_check_branch
          %247 = sbr.rel (%p245) target = $region32
        $region31: #{glu1d_forward.1} parent=23 // pred_region
          %p248 = scmp.lt.s32.totalorder %s21, 1
          %s249 = scalar_select %p248, %s21, 1
          %p250 = scmp.lt.s32.totalorder %s22, 0
          %s251 = scalar_select %p250, %s22, 0
          %s252 = sadd.s32 %s251, %s249
          %s253 = smul.addr %s252, 4
          %s254 = scalar_lea.vmem %s1, %s253
        $region32: #{glu1d_forward.1} parent=23 // pred_fallthru
          _
        // Predicated region
        $region33: #{glu1d_forward.1} parent=23 // pred_check
          %p255 = pneg %p124
        $region34: #{glu1d_forward.1} parent=23 // pred_check_branch
          %257 = sbr.rel (%p255) target = $region36
        $region35: #{glu1d_forward.1} parent=23 // pred_region
          %s258 = sadd.s32 %s22, 1
          %p259 = scmp.gt.s32.totalorder %s258, 0
          %s260 = scalar_select %p259, %s258, 0
          %p261 = scmp.lt.s32.totalorder %s260, 0
          %s262 = scalar_select %p261, %s260, 0
          %p263 = scmp.lt.s32.totalorder %s21, 1
          %s264 = scalar_select %p263, %s21, 1
          %p265 = scmp.lt.s32.totalorder %s262, 0
          %s266 = scalar_select %p265, %s262, 0
          %s267 = sadd.s32 %s266, %s264
          %s268 = smul.addr %s267, 4
          %s269 = scalar_lea.vmem %s2, %s268
          %s270 = sadd.s32 %s22, 1
          %p271 = scmp.gt.s32.totalorder %s270, 0
          %s272 = scalar_select %p271, %s270, 0
          %p273 = scmp.lt.s32.totalorder %s272, 0
          %s274 = scalar_select %p273, %s272, 0
        $region36: #{glu1d_forward.1} parent=23 // pred_fallthru
          _
      $region24: #{glu1d_forward.1} parent=5 // pred_fallthru
        _
      %p275 = scmp.le.s32.totalorder 1, %s14
      %p276 = scmp.lt.s32.totalorder %s14, 3
      %p277 = pnand %p275, %p276
      %p278 = pneg %p277
      // Predicated region
      $region37: #{glu1d_forward.1} parent=5 // pred_check
        _
      $region38: #{glu1d_forward.1} parent=5 // pred_check_branch
        %280 = sbr.rel (%p277) target = $region40
      $region39: #{glu1d_forward.1} parent=5 // pred_region
        %s281 = ssub.s32 %s14, 1
        %s282 = ssub.s32 %s24, 1
        %p283 = scmp.gt.s32.totalorder %s282, 0
        %s284 = scalar_select %p283, %s282, 0
        %p285 = scmp.lt.s32.totalorder %s284, 0
        %s286 = scalar_select %p285, %s284, 0
        %p287 = scmp.lt.s32.totalorder %s23, 1
        %s288 = scalar_select %p287, %s23, 1
        %p289 = scmp.lt.s32.totalorder %s286, 0
        %s290 = scalar_select %p289, %s286, 0
        %s291 = sadd.s32 %s290, %s288
        %s292 = smul.addr %s291, 4
        %s293 = scalar_lea.vmem %s0, %s292
        %p294 = pneg %p64
        %p295 = pneg %p61
        %p296 = scmp.lt.s32.totalorder %s23, 1
        %s297 = scalar_select %p296, %s23, 1
        %p298 = scmp.lt.s32.totalorder %s24, 0
        %s299 = scalar_select %p298, %s24, 0
        %s300 = sadd.s32 %s299, %s297
        %s301 = smul.addr %s300, 4
        %s302 = scalar_lea.vmem %s1, %s301
        %p303 = pneg %p92
        %p304 = pneg %p89
        %s305 = sadd.s32 %s24, 1
        %p306 = scmp.gt.s32.totalorder %s305, 0
        %s307 = scalar_select %p306, %s305, 0
        %p308 = scmp.lt.s32.totalorder %s307, 0
        %s309 = scalar_select %p308, %s307, 0
        %p310 = scmp.lt.s32.totalorder %s23, 1
        %s311 = scalar_select %p310, %s23, 1
        %p312 = scmp.lt.s32.totalorder %s309, 0
        %s313 = scalar_select %p312, %s309, 0
        %s314 = sadd.s32 %s313, %s311
        %s315 = smul.addr %s314, 4
        %s316 = scalar_lea.vmem %s2, %s315
        %p317 = pneg %p130
        %p318 = pneg %p127
        %p319 = pneg %p151
        %p320 = pneg %p148
        %p321 = pneg %p172
        %p322 = pneg %p169
        %p323 = pneg %p200
        %p324 = pneg %p197
        %s325 = sand.u32 %s187, 1
        %s326 = scalar_lea.sflag [#allocation3], %s325
        %s327 = sand.u32 %s187, 1
        %s328 = smul.addr %s327, 4
        %s329 = scalar_lea.vmem [#allocation2], %s328
        %s330 = ssub.s32 %s24, 1
        %p331 = scmp.gt.s32.totalorder %s330, 0
        %s332 = scalar_select %p331, %s330, 0
        %p333 = scmp.lt.s32.totalorder %s332, 0
        %s334 = scalar_select %p333, %s332, 0
        %p335 = scmp.lt.s32.totalorder %s23, 1
        %s336 = scalar_select %p335, %s23, 1
        %p337 = scmp.lt.s32.totalorder %s334, 0
        %s338 = scalar_select %p337, %s334, 0
        %s339 = sadd.s32 %s338, %s336
        %s340 = smul.addr %s339, 4
        %s341 = scalar_lea.vmem %s0, %s340
        %s342 = ssub.s32 %s24, 1
        %p343 = scmp.gt.s32.totalorder %s342, 0
        %s344 = scalar_select %p343, %s342, 0
        %p345 = scmp.lt.s32.totalorder %s344, 0
        %s346 = scalar_select %p345, %s344, 0
        %p347 = scmp.lt.s32.totalorder %s23, 1
        %s348 = scalar_select %p347, %s23, 1
        %p349 = scmp.lt.s32.totalorder %s24, 0
        %s350 = scalar_select %p349, %s24, 0
        %s351 = sadd.s32 %s350, %s348
        %s352 = smul.addr %s351, 4
        %s353 = scalar_lea.vmem %s1, %s352
        %s354 = sadd.s32 %s24, 1
        %p355 = scmp.gt.s32.totalorder %s354, 0
        %s356 = scalar_select %p355, %s354, 0
        %p357 = scmp.lt.s32.totalorder %s356, 0
        %s358 = scalar_select %p357, %s356, 0
        %p359 = scmp.lt.s32.totalorder %s23, 1
        %s360 = scalar_select %p359, %s23, 1
        %p361 = scmp.lt.s32.totalorder %s358, 0
        %s362 = scalar_select %p361, %s358, 0
        %s363 = sadd.s32 %s362, %s360
        %s364 = smul.addr %s363, 4
        %s365 = scalar_lea.vmem %s2, %s364
        %s366 = sadd.s32 %s24, 1
        %p367 = scmp.gt.s32.totalorder %s366, 0
        %s368 = scalar_select %p367, %s366, 0
        %p369 = scmp.lt.s32.totalorder %s368, 0
        %s370 = scalar_select %p369, %s368, 0
        %v371 = vld [vmem:[%s341] sm:$0xf]
        %v372 = vld [vmem:[%s353] sm:$0xf]
        %v373 = vld [vmem:[%s365] sm:$0xf]
        %s374 = smul.u32 %s24, 128
        %s375 = ssub.s32 %s374, 128
        %v376 = vlaneseq
        %v377 = vand.u32 %v376, 127
        %v378 = vadd.s32 %v377, 128
        %v379 = vadd.s32 %v377, 256
        %v380 = vstv %s375
        %v381 = vadd.s32 %v380, %v377
        %v382 = vadd.s32 %v380, %v378
        %v383 = vadd.s32 %v380, %v379
        %vm384 = vcmp.ge.s32.totalorder %v381, 0
        %vm385 = vcmp.ge.s32.totalorder %v382, 0
        %vm386 = vcmp.ge.s32.totalorder %v383, 0
        %vm387 = vcmp.lt.s32.totalorder %v381, 16
        %vm388 = vcmp.lt.s32.totalorder %v382, 16
        %vm389 = vcmp.lt.s32.totalorder %v383, 16
        %vm390 = vmand %vm384, %vm387
        %vm391 = vmand %vm385, %vm388
        %vm392 = vmand %vm386, %vm389
        %v393 = vsel %vm390, 1, 0
        %v394 = vsel %vm391, 1, 0
        %v395 = vsel %vm392, 1, 0
        %vm396 = vcmp.eq.s32.totalorder %v393, 1
        %vm397 = vcmp.eq.s32.totalorder %v394, 1
        %vm398 = vcmp.eq.s32.totalorder %v395, 1
        %v399 = vsel %vm396, %v371, 0.0
        %v400 = vsel %vm397, %v372, 0.0
        %v401 = vsel %vm398, %v373, 0.0
        %v403 = vrot.slane %v400, 4
        %404 = vrot.lane.b32.xlu0 %v403, 127
        %v405 = vpop.permute.xlu0 %404
        %408 = vrot.lane.b32.xlu0 %v400, 126
        %v409 = vpop.permute.xlu0 %408
        %410 = vrot.lane.b32.xlu0 %v401, 126
        %v411 = vpop.permute.xlu0 %410
        %vm412 = vcmask 1031168
        %v413 = vsel %vm412, %v409, %v411
        %vm414 = vcmask 1043456
        %v415 = vsel %vm414, %v399, %v405
        %v416 = vsel %vm414, %v400, %v405
        %v417 = vld [vmem:[%s3] sm:$0xff]
        %v418 = vld [vmem:[%s4] sm:$0xff]
        %420 = vset.pattern.permute.xlu0 0
        %421 = vperm.xlu0 %420, %v418
        %v422 = vpop.permute.xlu0 %421
        %426 = vrot.lane.b32.xlu0 %v415, 1
        %v427 = vpop.permute.xlu0 %426
        %428 = vrot.lane.b32.xlu0 %v416, 1
        %v429 = vpop.permute.xlu0 %428
        %430 = vrot.lane.b32.xlu0 %v409, 1
        %v431 = vpop.permute.xlu0 %430
        %432 = vrot.lane.b32.xlu0 %v413, 1
        %v433 = vpop.permute.xlu0 %432
        %vm434 = vcmask 7168
        %v435 = vsel %vm434, %v427, %v429
        %v436 = vsel %vm434, %v431, %v433
        %vm438 = vcmask 97280
        %v440 = vsel %vm438, %v417, 0
        %v442 = vsel %vm414, %v436, 0
        %444 = vmatprep.subr.mxu0 0.0
        %445 = vmatpush1.msra.mxu0 %v435
        %446 = vmatprep.subr.mxu0 0.0
        %447 = vmatpush1.msra.mxu0 %v442
        %448 = vmatprep.subr.mxu0 0.0
        %449 = vmatpush1.msra.mxu0 0.0
        %450 = vmatprep.subr.mxu0 0.0
        %451 = vmatpush1.msra.mxu0 0.0
        %452 = vmatprep.subr.mxu0 0.0
        %453 = vmatpush1.msra.mxu0 0.0
        %454 = vmatprep.subr.mxu0 0.0
        %455 = vmatpush1.msra.mxu0 0.0
        %456 = vmatprep.subr.mxu0 0.0
        %457 = vmatpush1.msra.mxu0 0.0
        %458 = vmatprep.subr.mxu0 0.0
        %459 = vmatpush1.msra.mxu0 0.0
        %460 = vmatprep.subr.mxu0 0.0
        %461 = vmatpush1.msra.mxu0 0.0
        %462 = vmatprep.subr.mxu0 0.0
        %463 = vmatpush1.msra.mxu0 0.0
        %464 = vmatprep.subr.mxu0 0.0
        %465 = vmatpush1.msra.mxu0 0.0
        %466 = vmatprep.subr.mxu0 0.0
        %467 = vmatpush1.msra.mxu0 0.0
        %468 = vmatprep.subr.mxu0 0.0
        %469 = vmatpush1.msra.mxu0 0.0
        %470 = vmatprep.subr.mxu0 0.0
        %471 = vmatpush1.msra.mxu0 0.0
        %472 = vmatprep.subr.mxu0 0.0
        %473 = vmatpush1.msra.mxu0 0.0
        %474 = vmatprep.subr.mxu0 0.0
        %475 = vmatpush1.msra.mxu0 0.0
        %476 = vmatprep.subr.mxu0 0.0
        %477 = vmatpush1.msra.mxu0 0.0
        %478 = vmatprep.subr.mxu0 0.0
        %479 = vmatpush1.msra.mxu0 0.0
        %480 = vmatprep.subr.mxu0 0.0
        %481 = vmatpush1.msra.mxu0 0.0
        %482 = vmatprep.subr.mxu0 0.0
        %483 = vmatpush1.msra.mxu0 0.0
        %484 = vmatprep.subr.mxu0 0.0
        %485 = vmatpush1.msra.mxu0 0.0
        %486 = vmatprep.subr.mxu0 0.0
        %487 = vmatpush1.msra.mxu0 0.0
        %488 = vmatprep.subr.mxu0 0.0
        %489 = vmatpush1.msra.mxu0 0.0
        %490 = vmatprep.subr.mxu0 0.0
        %491 = vmatpush1.msra.mxu0 0.0
        %492 = vmatprep.subr.mxu0 0.0
        %493 = vmatpush1.msra.mxu0 0.0
        %494 = vmatprep.subr.mxu0 0.0
        %495 = vmatpush1.msra.mxu0 0.0
        %496 = vmatprep.subr.mxu0 0.0
        %497 = vmatpush1.msra.mxu0 0.0
        %498 = vmatprep.subr.mxu0 0.0
        %499 = vmatpush1.msra.mxu0 0.0
        %500 = vmatprep.subr.mxu0 0.0
        %501 = vmatpush1.msra.mxu0 0.0
        %502 = vmatprep.subr.mxu0 0.0
        %503 = vmatpush1.msra.mxu0 0.0
        %504 = vmatprep.subr.mxu0 0.0
        %505 = vmatpush1.msra.mxu0 0.0
        %506 = vmatprep.subr.mxu0 0.0
        %507 = vmatpush1.msra.mxu0 0.0
        %508 = vmatprep.mubr.f32.mxu0 0.0
        %509 = vmatmul.mubr.f32.gmra.mrb[0].mxu0 %v440
        %v510 = vpop.f32.mrb[0].mxu0
        %v511 = vadd.f32 %v422, %v510
        %v512 = vpop.f32.mrb[0].mxu0
        %513 = vdwg.mxu0
        %v514 = vxor.u32 %v511, 2147483648
        %v515 = vmul.f32 %v514, 1.442695
        %v516 = vpow.pop %v515
        %v517 = vadd.f32 %v516, 1.0
        %v518 = vrcp.pop %v517
        %v519 = vmul.f32 1.0, %v518
        %v521 = vrot.slane %v519, 4
        %v523 = vmul.f32 %v511, %v521
        %524 = vst [vmem:[%s329] sm:$0xf] %v523
        %s525 = sand.u32 %s187, 1
        %s526 = scalar_lea.sflag [#allocation3], %s525
        %s527 = sand.u32 %s187, 1
        %s528 = smul.addr %s527, 4
        %s529 = scalar_lea.vmem [#allocation2], %s528
        // Predicated region
        $region41: #{glu1d_forward.1} parent=39 // pred_check
          %p530 = pneg %p197
        $region42: #{glu1d_forward.1} parent=39 // pred_check_branch
          %532 = sbr.rel (%p530) target = $region44
        $region43: #{glu1d_forward.1} parent=39 // pred_region
          %s534 = ssub.s32 64, 64
          %535 = vsyncadd %s526, %s534
          %s536 = sadd.s32 %s24, %s23
          %s537 = smul.addr %s536, 64
          %s538 = scalar_lea.hbm %s5, %s537
          %s540 = sshll.u32 %s529, 4
          %s541 = int_to_ptr.vmem [resolvable:$true] %s540
          %543 = dma.vmem_to_hbm [thread:$0]  %s541, 64, %s538, %s526
        $region44: #{glu1d_forward.1} parent=39 // pred_fallthru
          _
      $region40: #{glu1d_forward.1} parent=5 // pred_fallthru
        _
      %p544 = scmp.le.s32.totalorder 2, %s14
      // Predicated region
      $region45: #{glu1d_forward.1} parent=5 // pred_check
        %p545 = pneg %p544
      $region46: #{glu1d_forward.1} parent=5 // pred_check_branch
        %547 = sbr.rel (%p545) target = $region48
      $region47: #{glu1d_forward.1} parent=5 // pred_region
        %s548 = ssub.s32 %s14, 2
        // Predicated region
        $region49: #{glu1d_forward.1} parent=47 // pred_check
          %p549 = pneg %p203
        $region50: #{glu1d_forward.1} parent=47 // pred_check_branch
          %551 = sbr.rel (%p549) target = $region52
        $region51: #{glu1d_forward.1} parent=47 // pred_region
          %s552 = sand.u32 %s188, 1
          %s553 = scalar_lea.sflag [#allocation3], %s552
          %s554 = sand.u32 %s188, 1
          %s555 = smul.addr %s554, 4
          %s556 = scalar_lea.vmem [#allocation2], %s555
          %557 = dma.done %s553, 64
        $region52: #{glu1d_forward.1} parent=47 // pred_fallthru
          _
      $region48: #{glu1d_forward.1} parent=5 // pred_fallthru
        _
    $region6: #{glu1d_forward.1} parent=1 // loop_footer
      %s18 = sadd.s32 1, %s14
    $region7: #{glu1d_forward.1} parent=1 // loop_footer_branch
      %13 = sbr.rel target = $region3
    $region8: #{glu1d_forward.1} parent=1 // loop_exit
      _
    %558 = vsyncpa [#allocation3], 1
    %s559 = scalar_lea.sflag [#allocation3], 1
    %560 = vsyncpa %s559, 1

</llo_original>
